<compile_context>
chip_gen: v5e
topology: v5e:2x2
jax: 0.10.0
libtpu: 0.0.40
codegen_flags: <defaults>
</compile_context>

<pallas_src>
import functools

import jax
import jax.numpy as jnp
from jax.experimental import pallas as pl
from jax.experimental.pallas import tpu as pltpu


def _cdiv(a, b):
    return -(-a // b)


def _round_up(a, b):
    return _cdiv(a, b) * b


def _apply_activation(h, activation):
    if activation is None:
        return h
    if isinstance(activation, str):
        if activation == "relu":
            return jnp.maximum(h, 0.0)   # VPU
        if activation == "tanh":
            return jnp.tanh(h)           # EUP
        if activation == "gelu":
            return jax.nn.gelu(h)
        if activation == "sigmoid":
            return jax.nn.sigmoid(h)
        raise ValueError(f"unsupported activation: {activation}")
    # Arbitrary jnp-traceable callable (mirrors the torch module's callable).
    return activation(h)


def _nonlinear_kernel(*refs, activation, has_bias, acc_in_out):
    if acc_in_out:
        # Output is f32: accumulate straight into o_ref (resident across k).
        if has_bias:
            x_ref, w_ref, b_ref, o_ref = refs
        else:
            x_ref, w_ref, o_ref = refs
            b_ref = None
        acc_ref = o_ref
    else:
        if has_bias:
            x_ref, w_ref, b_ref, o_ref, acc_ref = refs
        else:
            x_ref, w_ref, o_ref, acc_ref = refs
            b_ref = None

    k = pl.program_id(2)

    @pl.when(k == 0)
    def _init():
        acc_ref[...] = jnp.zeros_like(acc_ref)

    # Canonical [tm, tk] @ [tk, tn] MXU matmul, f32 accumulation.
    acc_ref[...] += jnp.dot(x_ref[...], w_ref[...],
                            preferred_element_type=jnp.float32)

    needs_epilogue = has_bias or (activation is not None) or (not acc_in_out)
    if needs_epilogue:
        @pl.when(k == pl.num_programs(2) - 1)
        def _finalize():
            h = acc_ref[...]
            if has_bias:
                h = h + b_ref[...]
            h = _apply_activation(h, activation)
            o_ref[...] = h.astype(o_ref.dtype)


def _balanced_tile(dim, align, cap):
    """Aligned tile <= cap; full-dim block when the dim fits in one tile."""
    if dim <= cap:
        return dim                       # block == full array dim (always legal)
    nblk = _cdiv(dim, cap)
    return min(cap, _round_up(_cdiv(dim, nblk), align))


def nonlinear(x, weight, bias=None, activation=None, *,
              weight_transposed=False, compute_dtype=None,
              tm_cap=512, tn_cap=512, tk_cap=1024):
    """Pallas equivalent of NonLinear.forward.

    x:      [..., input_size]
    weight: [output_size, input_size] (torch layout) or [input_size, output_size]
            if weight_transposed=True.
    bias:   [output_size] or None
    activation: None | "relu" | "tanh" | "gelu" | "sigmoid" | jnp-callable
    compute_dtype: optional dtype to cast x/weight to (e.g. jnp.bfloat16).
    """
    orig_shape = x.shape
    K = orig_shape[-1]

    if weight_transposed:
        Kw, N = weight.shape
        wt = weight
    else:
        N, Kw = weight.shape
        # One-time layout change so the kernel runs the canonical
        # [tm,tk] @ [tk,tn] MXU orientation (no per-k-step XLU transpose).
        # TODO(synk): store the weight pre-transposed ([K, N]) module-side so
        # this per-call transpose disappears entirely.
        wt = jnp.transpose(weight)
    assert Kw == K, (Kw, K)

    out_dtype = x.dtype
    x2d = x.reshape(-1, K)
    M = x2d.shape[0]

    if compute_dtype is not None:
        cdt = jnp.dtype(compute_dtype)
        x2d = x2d.astype(cdt)
        wt = wt.astype(cdt)

    xdt = jnp.dtype(x2d.dtype)
    wdt = jnp.dtype(wt.dtype)
    ob = jnp.dtype(out_dtype).itemsize
    has_bias = bias is not None
    acc_in_out = jnp.dtype(out_dtype) == jnp.dtype(jnp.float32)

    # Per-dtype sublane alignment (f32 -> 8, bf16 -> 16, 8-bit -> 32).
    sub = max(8, 32 // max(xdt.itemsize, 1))

    # Tile selection: biggest aligned tiles up to the caps; no M/N padding.
    tm = _balanced_tile(M, sub, tm_cap)
    tn = _balanced_tile(N, 128, tn_cap)
    if K <= tk_cap:
        tk = K                           # full-K block: no padding at all
    else:
        nk = _cdiv(K, tk_cap)
        tk = _round_up(_cdiv(K, nk), 128)

    def footprint(tm_, tn_, tk_):
        f = 2 * (tm_ * tk_ * xdt.itemsize + tk_ * tn_ * wdt.itemsize
                 + tm_ * tn_ * ob)
        if not acc_in_out:
            f += tm_ * tn_ * 4
        if has_bias:
            f += 2 * 8 * tn_ * 4
        return f

    # Generation-aware VMEM ceiling (v7x: 64 MiB/TC, v5e/v6e: 128 MiB).
    try:
        vmem_cap = int(getattr(pltpu.get_tpu_info(), "vmem_capacity_bytes",
                               64 << 20))
    except Exception:  # pragma: no cover - interpret / unknown backend
        vmem_cap = 64 << 20
    vmem_ceiling = (vmem_cap * 4) // 5

    # Shrink tiles if they would not fit (rare with the caps above).
    while footprint(tm, tn, tk) > vmem_ceiling:
        if tk > 256:
            tk = _round_up(_cdiv(tk, 2), 128)
        elif tm > 2 * sub:
            tm = _round_up(_cdiv(tm, 2), sub)
        elif tn > 256:
            tn = _round_up(_cdiv(tn, 2), 128)
        else:
            break

    # v7x has 2 TensorCores sharded over the "parallel" axes: make sure there
    # are >= 2 parallel blocks when there is enough work to split.
    if _cdiv(M, tm) * _cdiv(N, tn) < 2:
        if N >= 256:
            tn = _round_up(_cdiv(N, 2), 128)
        elif M >= 512:
            tm = _round_up(_cdiv(M, 2), sub)

    # Only the K (reduction) tail is correctness-critical: pad K only, and
    # only when a K tile does not cover / divide it.
    Kp = K if tk >= K else _round_up(K, tk)
    if Kp != K:
        x2d = jnp.pad(x2d, ((0, 0), (0, Kp - K)))
        wt = jnp.pad(wt, ((0, Kp - K), (0, 0)))

    grid = (_cdiv(M, tm), _cdiv(N, tn), _cdiv(Kp, tk))

    inputs = [x2d, wt]
    in_specs = [
        pl.BlockSpec((tm, tk), lambda i, j, k: (i, k)),
        pl.BlockSpec((tk, tn), lambda i, j, k: (k, j)),
    ]
    if has_bias:
        b2d = bias.astype(jnp.float32).reshape(1, N)
        inputs.append(b2d)
        in_specs.append(pl.BlockSpec((1, tn), lambda i, j, k: (0, j)))

    scratch = [] if acc_in_out else [pltpu.VMEM((tm, tn), jnp.float32)]

    fp = footprint(tm, tn, tk)
    vmem_limit = int(min(vmem_ceiling, max(32 << 20, 2 * fp)))

    out = pl.pallas_call(
        functools.partial(_nonlinear_kernel, activation=activation,
                          has_bias=has_bias, acc_in_out=acc_in_out),
        out_shape=jax.ShapeDtypeStruct((M, N), out_dtype),
        grid_spec=pltpu.PrefetchScalarGridSpec(
            num_scalar_prefetch=0,
            grid=grid,
            in_specs=in_specs,
            out_specs=pl.BlockSpec((tm, tn), lambda i, j, k: (i, j)),
            scratch_shapes=scratch,
        ),
        compiler_params=pltpu.CompilerParams(
            dimension_semantics=("parallel", "parallel", "arbitrary"),
            vmem_limit_bytes=vmem_limit),
    )(*inputs)

    return out.reshape(orig_shape[:-1] + (N,))


if __name__ == "__main__":
    # Small shapes consistent with the module: a [batch, seq, input_size] input.
    batch, seq, input_size, output_size = 2, 8, 32, 64

    key = jax.random.PRNGKey(0)
    kx, kw, kb, kx2, kw2 = jax.random.split(key, 5)

    x = jax.random.normal(kx, (batch, seq, input_size), dtype=jnp.float32)

    bound = 1.0 / (input_size ** 0.5)
    weight = jax.random.uniform(
        kw, (output_size, input_size), minval=-bound, maxval=bound,
        dtype=jnp.float32)
    bias = jax.random.uniform(
        kb, (output_size,), minval=-bound, maxval=bound, dtype=jnp.float32)

    # Module default (activation=None), plus relu / tanh and bias=None variant.
    y_none = nonlinear(x, weight, bias, activation=None)
    y_relu = nonlinear(x, weight, bias, activation="relu")
    y_tanh_nb = nonlinear(x, weight, None, activation="tanh")

    # Narrow-output path (scratch f32 accumulator) with bf16 inputs/outputs.
    y_bf16 = nonlinear(x.astype(jnp.bfloat16), weight.astype(jnp.bfloat16),
                       bias, activation="relu")

    # Larger ragged case exercising the no-pad partial M edge blocks.
    M2, K2, N2 = 600, 64, 256
    x2 = jax.random.normal(kx2, (2, M2 // 2, K2), dtype=jnp.float32)
    w2 = jax.random.uniform(kw2, (N2, K2), minval=-0.125, maxval=0.125,
                            dtype=jnp.float32)
    y2 = nonlinear(x2, w2, None, activation=None)

    jax.block_until_ready((y_none, y_relu, y_tanh_nb, y_bf16, y2))

    # Reference checks against plain JAX.
    ref_lin = jnp.einsum("bsk,nk->bsn", x, weight, precision="highest")
    ref = ref_lin + bias
    assert y_none.shape == (batch, seq, output_size)
    assert jnp.allclose(y_none, ref, atol=1e-4, rtol=1e-4)
    assert jnp.allclose(y_relu, jnp.maximum(ref, 0.0), atol=1e-4, rtol=1e-4)
    assert jnp.allclose(y_tanh_nb, jnp.tanh(ref_lin), atol=1e-4, rtol=1e-4)
    assert jnp.allclose(y_bf16.astype(jnp.float32), jnp.maximum(ref, 0.0),
                        atol=5e-2, rtol=5e-2)
    ref2 = jnp.einsum("bsk,nk->bsn", x2, w2, precision="highest")
    assert jnp.allclose(y2, ref2, atol=5e-4, rtol=5e-4)

    print("KERNEL_OK")
</pallas_src>

<mosaic_0001>
module attributes {stable_mosaic.version = 11 : i64} {
  func.func @_nonlinear_kernel(%arg0: i32, %arg1: i32, %arg2: i32, %arg3: memref<16x32xf32, #tpu.memory_space<vmem>>, %arg4: memref<32x64xf32, #tpu.memory_space<vmem>>, %arg5: memref<1x64xf32, #tpu.memory_space<vmem>>, %arg6: memref<16x64xf32, #tpu.memory_space<vmem>>) attributes {dimension_semantics = [#tpu.dimension_semantics<parallel>, #tpu.dimension_semantics<parallel>, #tpu.dimension_semantics<arbitrary>], iteration_bounds = array<i64: 1, 1, 1>, scalar_prefetch = 0 : i64, scratch_operands = 0 : i64, tpu.core_type = #tpu.core_type<tc>, window_params = [{transform_indices = @transform_0, window_bounds = array<i64: 16, 32>}, {transform_indices = @transform_1, window_bounds = array<i64: 32, 64>}, {transform_indices = @transform_2, window_bounds = array<i64: 1, 64>}, {transform_indices = @transform_3, window_bounds = array<i64: 16, 64>}]} {
    %c0_i32 = arith.constant 0 : i32
    %0 = arith.cmpi eq, %arg2, %c0_i32 : i32
    %1 = arith.extui %0 : i1 to i32
    %c0_i32_0 = arith.constant 0 : i32
    %2 = arith.cmpi ne, %1, %c0_i32_0 : i32
    scf.if %2 {
      %cst_10 = arith.constant 0.000000e+00 : f32
      %12 = vector.broadcast %cst_10 : f32 to vector<16x64xf32>
      %c0_11 = arith.constant 0 : index
      %c0_12 = arith.constant 0 : index
      %13 = vector.load %arg6[%c0_11, %c0_12] : memref<16x64xf32, #tpu.memory_space<vmem>>, vector<16x64xf32>
      tpu.vector_store %arg6[%c0_11, %c0_12], %12 {strides = array<i32>} : memref<16x64xf32, #tpu.memory_space<vmem>>, vector<16x64xf32>,
    } else {
    }
    %c0 = arith.constant 0 : index
    %c0_1 = arith.constant 0 : index
    %3 = vector.load %arg6[%c0, %c0_1] : memref<16x64xf32, #tpu.memory_space<vmem>>, vector<16x64xf32>
    %c0_2 = arith.constant 0 : index
    %c0_3 = arith.constant 0 : index
    %4 = vector.load %arg3[%c0_2, %c0_3] : memref<16x32xf32, #tpu.memory_space<vmem>>, vector<16x32xf32>
    %c0_4 = arith.constant 0 : index
    %c0_5 = arith.constant 0 : index
    %5 = vector.load %arg4[%c0_4, %c0_5] : memref<32x64xf32, #tpu.memory_space<vmem>>, vector<32x64xf32>
    %cst = arith.constant dense<0.000000e+00> : vector<16x64xf32>
    %6 = tpu.matmul %4, %5, %cst {dimension_numbers = #tpu.dot_dimension_numbers<[1], [0], [0], [1], [0, 0, 1, 1], [], []>} : vector<16x32xf32>, vector<32x64xf32>, vector<16x64xf32> -> vector<16x64xf32>
    %7 = arith.addf %3, %6 : vector<16x64xf32>
    %c0_6 = arith.constant 0 : index
    %c0_7 = arith.constant 0 : index
    %8 = vector.load %arg6[%c0_6, %c0_7] : memref<16x64xf32, #tpu.memory_space<vmem>>, vector<16x64xf32>
    tpu.vector_store %arg6[%c0_6, %c0_7], %7 {strides = array<i32>} : memref<16x64xf32, #tpu.memory_space<vmem>>, vector<16x64xf32>,
    %c0_i32_8 = arith.constant 0 : i32
    %9 = arith.cmpi eq, %arg2, %c0_i32_8 : i32
    %10 = arith.extui %9 : i1 to i32
    %c0_i32_9 = arith.constant 0 : i32
    %11 = arith.cmpi ne, %10, %c0_i32_9 : i32
    scf.if %11 {
      %c0_10 = arith.constant 0 : index
      %c0_11 = arith.constant 0 : index
      %12 = vector.load %arg6[%c0_10, %c0_11] : memref<16x64xf32, #tpu.memory_space<vmem>>, vector<16x64xf32>
      %c0_12 = arith.constant 0 : index
      %c0_13 = arith.constant 0 : index
      %13 = vector.load %arg5[%c0_12, %c0_13] : memref<1x64xf32, #tpu.memory_space<vmem>>, vector<1x64xf32>
      %14 = vector.broadcast %13 : vector<1x64xf32> to vector<16x64xf32>
      %15 = arith.addf %12, %14 : vector<16x64xf32>
      %c0_14 = arith.constant 0 : index
      %c0_15 = arith.constant 0 : index
      %16 = vector.load %arg6[%c0_14, %c0_15] : memref<16x64xf32, #tpu.memory_space<vmem>>, vector<16x64xf32>
      tpu.vector_store %arg6[%c0_14, %c0_15], %15 {strides = array<i32>} : memref<16x64xf32, #tpu.memory_space<vmem>>, vector<16x64xf32>,
    } else {
    }
    return
  }
  func.func @transform_0(%arg0: i32, %arg1: i32, %arg2: i32) -> (i32, i32) {
    %c0_i32 = arith.constant 0 : i32
    return %arg0, %arg2 : i32, i32
  }
  func.func @transform_1(%arg0: i32, %arg1: i32, %arg2: i32) -> (i32, i32) {
    %c0_i32 = arith.constant 0 : i32
    return %arg2, %arg1 : i32, i32
  }
  func.func @transform_2(%arg0: i32, %arg1: i32, %arg2: i32) -> (i32, i32) {
    %c0_i32 = arith.constant 0 : i32
    %c0_i32_0 = arith.constant 0 : i32
    return %c0_i32, %arg1 : i32, i32
  }
  func.func @transform_3(%arg0: i32, %arg1: i32, %arg2: i32) -> (i32, i32) {
    %c0_i32 = arith.constant 0 : i32
    return %arg0, %arg1 : i32, i32
  }
}

</mosaic_0001>

<llo_original>
// kernel: tpu_custom_call.1
$region0: #{tpu_custom_call.1}
  #allocation0 [shape = 'u32[]', space=smem, size = 0x4, offset = 0x4, fixed_abs, tag = 'smem constant byte address 0x4 - core index']
  #allocation1 [shape = 'u32[72,128]{1,0:T(1,128)}', space=vmem, size = 0x9000, scoped, tag = 'internal scratch']
  %s0 = inlined_call_operand.hbm [shape: f32[16,32], index: 0, kind: input, shape index: {}]
  %s1 = inlined_call_operand.hbm [shape: f32[32,64], index: 1, kind: input, shape index: {}]
  %s2 = inlined_call_operand.vmem [shape: f32[1,64], index: 2, kind: input, shape index: {}]
  %s3 = inlined_call_operand.hbm [shape: f32[16,64], index: 3, kind: output, shape index: {}]
  %s4 = sld [smem:[#allocation0]]
  $region38: #{tpu_custom_call.1} parent=0
    _
  %s6 = ssub.s32 1, %s4
  %s7 = scalar_select 0, %s6, %s4
  $region1: #{tpu_custom_call.1} parent=0
    #allocation2 [shape = 'u8[8192]{0}', space=vmem, size = 0x2000, scoped, tag = 'input window, operand 0, single buffered']
    #allocation3 [shape = 's32[1]{0}', space=sflag, size = 0x4, scoped, tag = 'scoped memory for tpu_custom_call.1']
    #allocation4 [shape = 's32[1]{0}', space=sflag, size = 0x4, scoped, tag = 'scoped memory for tpu_custom_call.1']
    #allocation5 [shape = 'u8[16384]{0}', space=vmem, size = 0x4000, scoped, tag = 'input window, operand 1, single buffered']
    #allocation6 [shape = 's32[1]{0}', space=sflag, size = 0x4, scoped, tag = 'scoped memory for tpu_custom_call.1']
    #allocation7 [shape = 'u8[8192]{0}', space=vmem, size = 0x2000, scoped, tag = 'output window, operand 0, single buffered']
    %8 = vsyncpa [#allocation3], 0
    %9 = vsyncpa [#allocation6], 0
    %10 = vsyncpa [#allocation4], 0
    // Predicated region
    $region2: #{tpu_custom_call.1} parent=1 // pred_check
      _
    $region3: #{tpu_custom_call.1} parent=1 // pred_check_branch
      %12 = sbr.rel (0) target = $region5
    $region4: #{tpu_custom_call.1} parent=1 // pred_region
      %14 = vsyncadd [#allocation3], 0
      %s15 = sshll.u32 %s0, 4
      %s16 = int_to_ptr.hbm [resolvable:$true] %s15
      %s17 = sshll.u32 [#allocation2], 4
      %s18 = int_to_ptr.vmem [resolvable:$true] %s17
      %23 = dma.hbm_to_vmem [thread:$0]  %s16, 256, %s18, [#allocation3], 128, 128, 8
    $region5: #{tpu_custom_call.1} parent=1 // pred_fallthru
      _
    // Predicated region
    $region6: #{tpu_custom_call.1} parent=1 // pred_check
      _
    $region7: #{tpu_custom_call.1} parent=1 // pred_check_branch
      %25 = sbr.rel (0) target = $region9
    $region8: #{tpu_custom_call.1} parent=1 // pred_region
      %27 = vsyncadd [#allocation6], 0
      %s28 = sshll.u32 %s1, 4
      %s29 = int_to_ptr.hbm [resolvable:$true] %s28
      %s30 = sshll.u32 [#allocation5], 4
      %s31 = int_to_ptr.vmem [resolvable:$true] %s30
      %36 = dma.hbm_to_vmem [thread:$0]  %s29, 512, %s31, [#allocation6], 128, 128, 8
    $region9: #{tpu_custom_call.1} parent=1 // pred_fallthru
      _
    // Predicated region
    $region10: #{tpu_custom_call.1} parent=1 // pred_check
      _
    $region11: #{tpu_custom_call.1} parent=1 // pred_check_branch
      %38 = sbr.rel (0) target = $region13
    $region12: #{tpu_custom_call.1} parent=1 // pred_region
      _
    $region13: #{tpu_custom_call.1} parent=1 // pred_fallthru
      _
    // Predicated region
    $region14: #{tpu_custom_call.1} parent=1 // pred_check
      _
    $region15: #{tpu_custom_call.1} parent=1 // pred_check_branch
      %40 = sbr.rel (0) target = $region17
    $region16: #{tpu_custom_call.1} parent=1 // pred_region
      %42 = dma.done [#allocation3], 256
    $region17: #{tpu_custom_call.1} parent=1 // pred_fallthru
      _
    // Predicated region
    $region18: #{tpu_custom_call.1} parent=1 // pred_check
      _
    $region19: #{tpu_custom_call.1} parent=1 // pred_check_branch
      %44 = sbr.rel (0) target = $region21
    $region20: #{tpu_custom_call.1} parent=1 // pred_region
      %46 = dma.done [#allocation6], 512
    $region21: #{tpu_custom_call.1} parent=1 // pred_fallthru
      _
    %p47 = scmp.eq.s32.totalorder 0, 0
    // Predicated region
    $region22: #{tpu_custom_call.1} parent=1 // pred_check
      %p48 = pneg %p47
    $region23: #{tpu_custom_call.1} parent=1 // pred_check_branch
      %50 = sbr.rel (%p48) target = $region25
    $region24: #{tpu_custom_call.1} parent=1 // pred_region
      %vm51 = vcmask 523264
      %52 = vst.msk [vmem:[#allocation7] sm:$0xff] %vm51, 0.0
      %53 = vst.msk [vmem:[#allocation7 + $0x8] sm:$0xff] %vm51, 0.0
    $region25: #{tpu_custom_call.1} parent=1 // pred_fallthru
      _
    %v54 = vld [vmem:[#allocation7] sm:$0xff]
    %v55 = vld [vmem:[#allocation7 + $0x8] sm:$0xff]
    %v56 = vld [vmem:[#allocation2] sm:$0xff]
    %v57 = vld [vmem:[#allocation2 + $0x8] sm:$0xff]
    %v58 = vld [vmem:[#allocation5] sm:$0xff]
    %v59 = vld [vmem:[#allocation5 + $0x8] sm:$0xff]
    %v60 = vld [vmem:[#allocation5 + $0x10] sm:$0xff]
    %v61 = vld [vmem:[#allocation5 + $0x18] sm:$0xff]
    %vm62 = vcmask 261120
    %v64 = vsel %vm62, %v56, 0
    %v67 = vsel %vm62, %v57, 0
    %69 = vmatpush.msra.mxu0 0.0
    %70 = vmatpush.msra.mxu0 0.0
    %71 = vmatpush.msra.mxu0 0.0
    %72 = vmatpush.msra.mxu0 0.0
    %73 = vmatpush.msra.mxu0 0.0
    %74 = vmatpush.msra.mxu0 0.0
    %75 = vmatpush.msra.mxu0 0.0
    %76 = vmatpush.msra.mxu0 0.0
    %77 = vmatpush.msra.mxu0 0.0
    %78 = vmatpush.msra.mxu0 0.0
    %79 = vmatpush.msra.mxu0 0.0
    %80 = vmatpush.msra.mxu0 0.0
    %81 = vmatpush.msra.mxu0 %v61
    %82 = vmatpush.msra.mxu0 %v60
    %83 = vmatpush.msra.mxu0 %v59
    %84 = vmatpush.msra.mxu0 %v58
    %85 = vmatmul.f32.gmra.mxu0 %v64
    %v86 = vpop.f32.mrf.mxu0
    %v87 = vadd.f32 0.0, %v86
    %88 = vmatmul.f32.gmra.mxu0 %v67
    %v89 = vpop.f32.mrf.mxu0
    %v90 = vadd.f32 0.0, %v89
    %91 = vdwg.mxu0
    %v92 = vadd.f32 %v54, %v87
    %v93 = vadd.f32 %v55, %v90
    %vm94 = vcmask 523264
    %95 = vst.msk [vmem:[#allocation7] sm:$0xff] %vm94, %v92
    %96 = vst.msk [vmem:[#allocation7 + $0x8] sm:$0xff] %vm94, %v93
    // Predicated region
    $region26: #{tpu_custom_call.1} parent=1 // pred_check
      %p97 = pneg %p47
    $region27: #{tpu_custom_call.1} parent=1 // pred_check_branch
      %99 = sbr.rel (%p97) target = $region29
    $region28: #{tpu_custom_call.1} parent=1 // pred_region
      %v100 = vld [vmem:[#allocation7] sm:$0xff]
      %v101 = vld [vmem:[#allocation7 + $0x8] sm:$0xff]
      %v102 = vld [vmem:[%s2] sm:$0x1]
      %v104 = vperm.slane %v102, 0
      %v106 = vadd.f32 %v100, %v104
      %v107 = vadd.f32 %v101, %v104
      %108 = vst.msk [vmem:[#allocation7] sm:$0xff] %vm94, %v106
      %109 = vst.msk [vmem:[#allocation7 + $0x8] sm:$0xff] %vm94, %v107
    $region29: #{tpu_custom_call.1} parent=1 // pred_fallthru
      _
    // Predicated region
    $region30: #{tpu_custom_call.1} parent=1 // pred_check
      _
    $region31: #{tpu_custom_call.1} parent=1 // pred_check_branch
      %111 = sbr.rel (0) target = $region33
    $region32: #{tpu_custom_call.1} parent=1 // pred_region
      %113 = vsyncadd [#allocation4], 0
      %s114 = sshll.u32 [#allocation7], 4
      %s115 = int_to_ptr.vmem [resolvable:$true] %s114
      %s116 = sshll.u32 %s3, 4
      %s117 = int_to_ptr.hbm [resolvable:$true] %s116
      %122 = dma.vmem_to_hbm [thread:$0]  %s115, 256, %s117, [#allocation4], 128, 128, 8
    $region33: #{tpu_custom_call.1} parent=1 // pred_fallthru
      _
    // Predicated region
    $region34: #{tpu_custom_call.1} parent=1 // pred_check
      _
    $region35: #{tpu_custom_call.1} parent=1 // pred_check_branch
      %124 = sbr.rel (0) target = $region37
    $region36: #{tpu_custom_call.1} parent=1 // pred_region
      %126 = dma.done [#allocation4], 256
    $region37: #{tpu_custom_call.1} parent=1 // pred_fallthru
      _
    %127 = vsyncpa [#allocation3], 1
    %128 = vsyncpa [#allocation6], 1
    %129 = vsyncpa [#allocation4], 1

</llo_original>
